<compile_context>
chip_gen: v7x
topology: tpu7x:2x2x1
jax: 0.10.0
libtpu: 0.0.40
codegen_flags: <defaults>
</compile_context>

<pallas_src>
import jax
import jax.numpy as jnp
from jax import lax
from jax.experimental import pallas as pl
from jax.experimental.pallas import tpu as pltpu


# ----------------------------------------------------------------------------------
# Tile selection helpers
# ----------------------------------------------------------------------------------
def _vmem_capacity_bytes():
    """Per-core VMEM capacity; conservative 64 MiB (v7x) if the query fails."""
    try:
        info = pltpu.get_tpu_info()
        cap = getattr(info, "vmem_capacity_bytes", None)
        if cap:
            return int(cap)
    except Exception:
        pass
    return 64 << 20


def _divisor_tile(total, max_tile, quantum):
    """Largest multiple of `quantum` <= max_tile that divides `total`, or None."""
    cand = (min(max_tile, total) // quantum) * quantum
    while cand >= quantum:
        if total % cand == 0:
            return cand
        cand -= quantum
    return None


def _pick_tiles(C, T, itemsize, block_budget, max_lanes):
    """Choose (tC, tT) so a single x block stays within `block_budget` bytes."""
    # Whole array fits in one block.
    if C * T * itemsize <= block_budget and T <= max_lanes:
        return C, T
    # Keep all channels per block; tile the lane (T) axis.
    if C * 128 * itemsize <= block_budget:
        tC = C
        lanes = (block_budget // (C * itemsize)) // 128 * 128
        lanes = max(128, min(lanes, max_lanes))
        if T <= lanes:
            return tC, T
        # Prefer a lane tile that divides T (no ragged edge), down to lanes // 2.
        cand = lanes
        lo = max(128, lanes // 2)
        while cand >= lo:
            if T % cand == 0:
                return tC, cand
            cand -= 128
        return tC, lanes
    # Very large C: tile the channel axis as well.
    tT = T if T <= 512 else 512
    max_tc = max(8, (block_budget // (tT * itemsize)) // 8 * 8)
    tC = _divisor_tile(C, max_tc, 8)
    if tC is None:
        tC = min(C, max_tc)  # ragged last C block; Pallas writes back only valid rows
    return tC, tT


# ----------------------------------------------------------------------------------
# Kernel
# ----------------------------------------------------------------------------------
def _make_kernel(tT, acc_w, n_t, T, use_mxu, needs_edge):
    edge_limit = T - (n_t - 1) * tT  # valid lanes of the last (possibly ragged) tile

    def kernel(x_ref, m_ref, sx_ref, sx2_ref, acc_sx, acc_x2):
        # x_ref  : (tC, tT) native dtype          m_ref : (m_rows, tT)
        # sx_ref, sx2_ref : (tC, 1) f32 per-(b, c-block) partial sums
        # acc_sx, acc_x2  : (tC, acc_w) f32 accumulators, persist over the t axis
        t = pl.program_id(2)
        last = pl.num_programs(2) - 1

        @pl.when(t == 0)
        def _init():
            acc_sx[...] = jnp.zeros_like(acc_sx)
            acc_x2[...] = jnp.zeros_like(acc_x2)

        def accumulate(limit):
            """Accumulate partial sums over the first `limit` (static) lanes."""
            # sum_t x*m on the MXU (idle otherwise).  Only used for clean 128-multiple
            # contractions; ragged edge tiles / odd single-tile T fall back to cheap
            # VPU adds.  Exact because the mask is {0, 1}.
            do_dot = use_mxu and limit >= 128 and (limit % 128 == 0)
            if do_dot:
                part = lax.dot_general(
                    x_ref[:, :limit], m_ref[:, :limit],
                    (((1,), (1,)), ((), ())),
                    preferred_element_type=jnp.float32)          # (tC, 8), identical cols
                acc_sx[:, 0:1] += part[:, 0:1]

            n_full = limit // 128
            rem = limit - n_full * 128

            if n_full > 0:
                def _chunk(i, carry):
                    off = pl.multiple_of(i * 128, 128)
                    xc = x_ref[:, pl.ds(off, 128)]
                    mc = m_ref[0:1, pl.ds(off, 128)]
                    if use_mxu:
                        # (x*m) is exact in bf16 for a {0,1} mask; (x*m)^2 == x^2*m.
                        xm = (xc * mc).astype(jnp.float32)
                        if not do_dot:
                            acc_sx[...] += xm
                        acc_x2[...] += xm * xm
                    else:
                        xf = xc.astype(jnp.float32)
                        mf = mc.astype(jnp.float32)
                        xmf = xf * mf
                        acc_sx[...] += xmf
                        acc_x2[...] += xf * xmf
                    return carry

                lax.fori_loop(0, n_full, _chunk, 0, unroll=(n_full <= 8))

            if rem > 0:
                a = n_full * 128
                xc = x_ref[:, a:a + rem]
                mc = m_ref[0:1, a:a + rem]
                if use_mxu:
                    xm = (xc * mc).astype(jnp.float32)
                    if not do_dot:
                        acc_sx[:, :rem] += xm
                    acc_x2[:, :rem] += xm * xm
                else:
                    xf = xc.astype(jnp.float32)
                    mf = mc.astype(jnp.float32)
                    xmf = xf * mf
                    acc_sx[:, :rem] += xmf
                    acc_x2[:, :rem] += xf * xmf

        if needs_edge:
            # Interior tiles never pay for edge handling; the last tile only reads its
            # statically-valid lane prefix (no per-element select, no garbage lanes).
            @pl.when(t != last)
            def _interior():
                accumulate(tT)

            @pl.when(t == last)
            def _edge():
                accumulate(edge_limit)
        else:
            accumulate(tT)

        @pl.when(t == last)
        def _final():
            sx_ref[...] = jnp.sum(acc_sx[...], axis=1, keepdims=True)
            sx2_ref[...] = jnp.sum(acc_x2[...], axis=1, keepdims=True)

    return kernel


# ----------------------------------------------------------------------------------
# Wrapper
# ----------------------------------------------------------------------------------
def learnable_norm_reg_loss(x, mask, learnable_var, lambda_reg=1.0,
                            block_bytes=None, max_lanes=16384):
    """x: (B, C, T) float, mask: (B, T) {0,1}, learnable_var: scalar."""
    B, C, T = x.shape
    itemsize = x.dtype.itemsize

    vmem_cap = _vmem_capacity_bytes()
    if block_bytes is None:
        # ~8 MiB x-blocks on 64 MiB-VMEM parts (v7x), ~16 MiB on 128 MiB parts.
        block_bytes = max(1 << 20, min(16 << 20, vmem_cap // 8))

    tC, tT = _pick_tiles(C, T, itemsize, block_bytes, max_lanes)
    n_c = pl.cdiv(C, tC)
    n_t = pl.cdiv(T, tT)
    needs_edge = (T % tT) != 0
    acc_w = min(tT, 128)

    # bf16 inputs: offload the sum_t(x*m) reduction to the MXU (exact for a 0/1 mask).
    use_mxu = (x.dtype == jnp.bfloat16) and tT >= 128

    # denom = number of valid positions: tiny (B, T) reduction, do it in JAX.
    denom = jnp.sum(mask.astype(jnp.float32))

    if use_mxu:
        m_rows = 8  # sublane-friendly RHS for the matvec; every row is the mask
        mask_in = jnp.broadcast_to(mask.astype(x.dtype)[:, None, :], (B, m_rows, T))
    else:
        m_rows = 1
        mask_in = mask.astype(jnp.float32).reshape(B, 1, T)
    msize = mask_in.dtype.itemsize

    kernel = _make_kernel(tT, acc_w, n_t, T, use_mxu, needs_edge)

    # ---- VMEM budget (inputs double-buffered; compute temporaries are per-chunk) ---
    x_blk = tC * tT * itemsize
    m_blk = 8 * tT * msize                       # mask block, sublane-padded to 8
    out_blk = tC * 128 * 4                       # (tC, 1) blocks pad the lane dim
    acc_bytes = 2 * tC * acc_w * 4
    tmp_bytes = 8 * tC * 128 * 4                 # per-chunk f32 temporaries + headroom
    vmem_need = 2 * (x_blk + m_blk) + 2 * 2 * out_blk + acc_bytes + tmp_bytes + (1 << 20)
    vmem_limit = int(min(max(2 * vmem_need, 32 << 20), int(0.75 * vmem_cap)))
    vmem_limit = max(vmem_limit, vmem_need + (2 << 20))

    cost = pl.CostEstimate(
        flops=6 * B * C * T,
        transcendentals=0,
        bytes_accessed=B * C * T * itemsize + n_c * B * m_rows * T * msize + 4 * B * C * 4,
    )

    sum_x, sum_x2 = pl.pallas_call(
        kernel,
        out_shape=(jax.ShapeDtypeStruct((B, C, 1), jnp.float32),
                   jax.ShapeDtypeStruct((B, C, 1), jnp.float32)),
        grid_spec=pltpu.PrefetchScalarGridSpec(
            num_scalar_prefetch=0,
            grid=(B, n_c, n_t),
            in_specs=[
                pl.BlockSpec((None, tC, tT), lambda b, c, t: (b, c, t)),       # x
                pl.BlockSpec((None, m_rows, tT), lambda b, c, t: (b, 0, t)),   # mask
            ],
            out_specs=[
                pl.BlockSpec((None, tC, 1), lambda b, c, t: (b, c, 0)),        # sum(x*m)
                pl.BlockSpec((None, tC, 1), lambda b, c, t: (b, c, 0)),        # sum(x^2*m)
            ],
            scratch_shapes=[pltpu.VMEM((tC, acc_w), jnp.float32),
                            pltpu.VMEM((tC, acc_w), jnp.float32)],
        ),
        compiler_params=pltpu.CompilerParams(
            dimension_semantics=("parallel", "parallel", "arbitrary"),
            vmem_limit_bytes=vmem_limit,
        ),
        cost_estimate=cost,
    )(x, mask_in)

    # ---- tiny O(B*C) epilogue in plain JAX -----------------------------------------
    sx = jnp.sum(sum_x[..., 0], axis=0)      # (C,)
    sx2 = jnp.sum(sum_x2[..., 0], axis=0)    # (C,)
    mean = sx / denom
    var = sx2 / denom - mean * mean
    lv = jnp.asarray(learnable_var, jnp.float32)
    mean_loss = jnp.mean(mean * mean)
    var_loss = jnp.mean((var - lv) * (var - lv))
    return jnp.asarray(lambda_reg, jnp.float32) * (mean_loss + var_loss)


# ----------------------------------------------------------------------------------
# Pure-JAX reference mirroring the PyTorch forward exactly
# ----------------------------------------------------------------------------------
def _reference(x, mask, learnable_var, lambda_reg=1.0):
    xf = x.astype(jnp.float32)
    me = mask.astype(jnp.float32)[:, None, :]
    denom = jnp.sum(me, axis=(0, 2), keepdims=True)
    mean = jnp.sum(xf * me, axis=(0, 2), keepdims=True) / denom
    var = jnp.sum(xf * xf * me, axis=(0, 2), keepdims=True) / denom - mean ** 2
    return lambda_reg * (jnp.mean(mean ** 2) + jnp.mean((var - learnable_var) ** 2))


if __name__ == "__main__":
    key = jax.random.PRNGKey(0)
    lv = jnp.float32(1.0)   # nn.Parameter(torch.tensor(1.0)) init
    k1, k2, k3, k4, k5, k6 = jax.random.split(key, 6)

    # 1) small f32, single tile (pure-VPU path).
    x1 = jax.random.normal(k1, (2, 4, 16), dtype=jnp.float32)
    m1 = (jax.random.uniform(k2, (2, 16)) < 0.75).astype(jnp.float32)
    out1 = jax.block_until_ready(learnable_norm_reg_loss(x1, m1, lv))
    ref1 = _reference(x1, m1, lv)
    assert jnp.allclose(out1, ref1, rtol=1e-5, atol=1e-6), (out1, ref1)

    # 2) f32, tiled T with a ragged last tile (forced tiny block budget).
    x2 = jax.random.normal(k3, (2, 8, 400), dtype=jnp.float32)
    m2 = (jax.random.uniform(k4, (2, 400)) < 0.6).astype(jnp.float32)
    out2 = jax.block_until_ready(learnable_norm_reg_loss(x2, m2, lv, block_bytes=8192))
    ref2 = _reference(x2, m2, lv)
    assert jnp.allclose(out2, ref2, rtol=1e-5, atol=1e-6), (out2, ref2)

    # 3) bf16, single tile (MXU matvec path).
    x3 = jax.random.normal(k5, (2, 16, 512), dtype=jnp.float32).astype(jnp.bfloat16)
    m3 = (jax.random.uniform(k6, (2, 512)) < 0.7).astype(jnp.float32)
    out3 = jax.block_until_ready(learnable_norm_reg_loss(x3, m3, lv, lambda_reg=0.5))
    ref3 = _reference(x3, m3, lv, lambda_reg=0.5)
    assert jnp.allclose(out3, ref3, rtol=5e-4, atol=1e-6), (out3, ref3)

    # 4) bf16, tiled T with ragged edge (MXU interior tiles + VPU edge fallback).
    x4 = x3[:, :, :400]
    m4 = m3[:, :400]
    out4 = jax.block_until_ready(learnable_norm_reg_loss(x4, m4, lv, block_bytes=8192))
    ref4 = _reference(x4, m4, lv)
    assert jnp.allclose(out4, ref4, rtol=5e-4, atol=1e-6), (out4, ref4)

    print("KERNEL_OK")
</pallas_src>

<mosaic_0001>
module attributes {stable_mosaic.version = 11 : i64} {
  func.func @kernel(%arg0: i32, %arg1: i32, %arg2: i32, %arg3: memref<1x4x16xf32, #tpu.memory_space<vmem>>, %arg4: memref<1x1x16xf32, #tpu.memory_space<vmem>>, %arg5: memref<1x4x1xf32, #tpu.memory_space<vmem>>, %arg6: memref<1x4x1xf32, #tpu.memory_space<vmem>>, %arg7: memref<4x16xf32, #tpu.memory_space<vmem>>, %arg8: memref<4x16xf32, #tpu.memory_space<vmem>>) attributes {dimension_semantics = [#tpu.dimension_semantics<parallel>, #tpu.dimension_semantics<parallel>, #tpu.dimension_semantics<arbitrary>], iteration_bounds = array<i64: 2, 1, 1>, scalar_prefetch = 0 : i64, scratch_operands = 2 : i64, tpu.core_type = #tpu.core_type<tc>, window_params = [{transform_indices = @transform_0, window_bounds = array<i64: 1, 4, 16>}, {transform_indices = @transform_1, window_bounds = array<i64: 1, 1, 16>}, {transform_indices = @transform_2, window_bounds = array<i64: 1, 4, 1>}, {transform_indices = @transform_3, window_bounds = array<i64: 1, 4, 1>}]} {
    %c0_i32 = arith.constant 0 : i32
    %0 = arith.cmpi eq, %arg2, %c0_i32 : i32
    %1 = arith.extui %0 : i1 to i32
    %c0_i32_0 = arith.constant 0 : i32
    %2 = arith.cmpi ne, %1, %c0_i32_0 : i32
    scf.if %2 {
      %cst = arith.constant 0.000000e+00 : f32
      %19 = vector.broadcast %cst : f32 to vector<4x16xf32>
      %c0_16 = arith.constant 0 : index
      %c0_17 = arith.constant 0 : index
      %20 = vector.load %arg7[%c0_16, %c0_17] : memref<4x16xf32, #tpu.memory_space<vmem>>, vector<4x16xf32>
      tpu.vector_store %arg7[%c0_16, %c0_17], %19 {strides = array<i32>} : memref<4x16xf32, #tpu.memory_space<vmem>>, vector<4x16xf32>,
      %cst_18 = arith.constant 0.000000e+00 : f32
      %21 = vector.broadcast %cst_18 : f32 to vector<4x16xf32>
      %c0_19 = arith.constant 0 : index
      %c0_20 = arith.constant 0 : index
      %22 = vector.load %arg8[%c0_19, %c0_20] : memref<4x16xf32, #tpu.memory_space<vmem>>, vector<4x16xf32>
      tpu.vector_store %arg8[%c0_19, %c0_20], %21 {strides = array<i32>} : memref<4x16xf32, #tpu.memory_space<vmem>>, vector<4x16xf32>,
    } else {
    }
    %c0 = arith.constant 0 : index
    %c0_1 = arith.constant 0 : index
    %c0_2 = arith.constant 0 : index
    %3 = vector.load %arg3[%c0, %c0_1, %c0_2] : memref<1x4x16xf32, #tpu.memory_space<vmem>>, vector<1x4x16xf32>
    %4 = vector.shape_cast %3 : vector<1x4x16xf32> to vector<4x16xf32>
    %c0_3 = arith.constant 0 : index
    %c0_4 = arith.constant 0 : index
    %c0_5 = arith.constant 0 : index
    %5 = vector.load %arg4[%c0_3, %c0_4, %c0_5] : memref<1x1x16xf32, #tpu.memory_space<vmem>>, vector<1x1x16xf32>
    %6 = vector.shape_cast %5 : vector<1x1x16xf32> to vector<1x16xf32>
    %7 = vector.broadcast %6 : vector<1x16xf32> to vector<4x16xf32>
    %8 = arith.mulf %4, %7 : vector<4x16xf32>
    %c0_6 = arith.constant 0 : index
    %c0_7 = arith.constant 0 : index
    %9 = vector.load %arg7[%c0_6, %c0_7] : memref<4x16xf32, #tpu.memory_space<vmem>>, vector<4x16xf32>
    %10 = arith.addf %9, %8 : vector<4x16xf32>
    %c0_8 = arith.constant 0 : index
    %c0_9 = arith.constant 0 : index
    %11 = vector.load %arg7[%c0_8, %c0_9] : memref<4x16xf32, #tpu.memory_space<vmem>>, vector<4x16xf32>
    tpu.vector_store %arg7[%c0_8, %c0_9], %10 {strides = array<i32>} : memref<4x16xf32, #tpu.memory_space<vmem>>, vector<4x16xf32>,
    %c0_10 = arith.constant 0 : index
    %c0_11 = arith.constant 0 : index
    %12 = vector.load %arg8[%c0_10, %c0_11] : memref<4x16xf32, #tpu.memory_space<vmem>>, vector<4x16xf32>
    %13 = arith.mulf %4, %8 : vector<4x16xf32>
    %14 = arith.addf %12, %13 : vector<4x16xf32>
    %c0_12 = arith.constant 0 : index
    %c0_13 = arith.constant 0 : index
    %15 = vector.load %arg8[%c0_12, %c0_13] : memref<4x16xf32, #tpu.memory_space<vmem>>, vector<4x16xf32>
    tpu.vector_store %arg8[%c0_12, %c0_13], %14 {strides = array<i32>} : memref<4x16xf32, #tpu.memory_space<vmem>>, vector<4x16xf32>,
    %c0_i32_14 = arith.constant 0 : i32
    %16 = arith.cmpi eq, %arg2, %c0_i32_14 : i32
    %17 = arith.extui %16 : i1 to i32
    %c0_i32_15 = arith.constant 0 : i32
    %18 = arith.cmpi ne, %17, %c0_i32_15 : i32
    scf.if %18 {
      %c0_16 = arith.constant 0 : index
      %c0_17 = arith.constant 0 : index
      %19 = vector.load %arg7[%c0_16, %c0_17] : memref<4x16xf32, #tpu.memory_space<vmem>>, vector<4x16xf32>
      %cst = arith.constant dense<0.000000e+00> : vector<4xf32>
      %20 = vector.multi_reduction <add>, %19, %cst [1] : vector<4x16xf32> to vector<4xf32>
      %21 = vector.shape_cast %20 : vector<4xf32> to vector<4x1xf32>
      %c0_18 = arith.constant 0 : index
      %c0_19 = arith.constant 0 : index
      %c0_20 = arith.constant 0 : index
      %22 = vector.load %arg5[%c0_18, %c0_19, %c0_20] : memref<1x4x1xf32, #tpu.memory_space<vmem>>, vector<1x4x1xf32>
      %23 = vector.shape_cast %22 : vector<1x4x1xf32> to vector<4x1xf32>
      %24 = vector.shape_cast %21 : vector<4x1xf32> to vector<1x4x1xf32>
      tpu.vector_store %arg5[%c0_18, %c0_19, %c0_20], %24 {strides = array<i32>} : memref<1x4x1xf32, #tpu.memory_space<vmem>>, vector<1x4x1xf32>,
      %c0_21 = arith.constant 0 : index
      %c0_22 = arith.constant 0 : index
      %25 = vector.load %arg8[%c0_21, %c0_22] : memref<4x16xf32, #tpu.memory_space<vmem>>, vector<4x16xf32>
      %cst_23 = arith.constant dense<0.000000e+00> : vector<4xf32>
      %26 = vector.multi_reduction <add>, %25, %cst_23 [1] : vector<4x16xf32> to vector<4xf32>
      %27 = vector.shape_cast %26 : vector<4xf32> to vector<4x1xf32>
      %c0_24 = arith.constant 0 : index
      %c0_25 = arith.constant 0 : index
      %c0_26 = arith.constant 0 : index
      %28 = vector.load %arg6[%c0_24, %c0_25, %c0_26] : memref<1x4x1xf32, #tpu.memory_space<vmem>>, vector<1x4x1xf32>
      %29 = vector.shape_cast %28 : vector<1x4x1xf32> to vector<4x1xf32>
      %30 = vector.shape_cast %27 : vector<4x1xf32> to vector<1x4x1xf32>
      tpu.vector_store %arg6[%c0_24, %c0_25, %c0_26], %30 {strides = array<i32>} : memref<1x4x1xf32, #tpu.memory_space<vmem>>, vector<1x4x1xf32>,
    } else {
    }
    return
  }
  func.func @transform_0(%arg0: i32, %arg1: i32, %arg2: i32) -> (i32, i32, i32) {
    %c0_i32 = arith.constant 0 : i32
    return %arg0, %arg1, %arg2 : i32, i32, i32
  }
  func.func @transform_1(%arg0: i32, %arg1: i32, %arg2: i32) -> (i32, i32, i32) {
    %c0_i32 = arith.constant 0 : i32
    %c0_i32_0 = arith.constant 0 : i32
    return %arg0, %c0_i32, %arg2 : i32, i32, i32
  }
  func.func @transform_2(%arg0: i32, %arg1: i32, %arg2: i32) -> (i32, i32, i32) {
    %c0_i32 = arith.constant 0 : i32
    %c0_i32_0 = arith.constant 0 : i32
    return %arg0, %arg1, %c0_i32 : i32, i32, i32
  }
  func.func @transform_3(%arg0: i32, %arg1: i32, %arg2: i32) -> (i32, i32, i32) {
    %c0_i32 = arith.constant 0 : i32
    %c0_i32_0 = arith.constant 0 : i32
    return %arg0, %arg1, %c0_i32 : i32, i32, i32
  }
}

</mosaic_0001>

<llo_original>
// kernel: tpu_custom_call.1
$region0: #{tpu_custom_call.1}
  #allocation0 [shape = 'u32[]', space=smem, size = 0x4, offset = 0x4, fixed_abs, tag = 'smem constant byte address 0x4 - core index']
  #allocation1 [shape = 'u32[144,128]{1,0:T(1,128)}', space=vmem, size = 0x12000, scoped, tag = 'internal scratch']
  #allocation2 [shape = 'f32[4,16]{1,0:T(4,128)}', space=vmem, size = 0x800, scoped, tag = 'scratch operand']
  #allocation3 [shape = 'f32[4,16]{1,0:T(4,128)}', space=vmem, size = 0x800, scoped, tag = 'scratch operand']
  %s0 = inlined_call_operand.hbm [shape: f32[2,4,16], index: 0, kind: input, shape index: {}]
  %s1 = inlined_call_operand.vmem [shape: f32[2,1,16], index: 1, kind: input, shape index: {}]
  %s2 = inlined_call_operand.vmem [shape: f32[2,4,1], index: 2, kind: output, shape index: {0}]
  %s3 = inlined_call_operand.vmem [shape: f32[2,4,1], index: 3, kind: output, shape index: {1}]
  %4 = xla_tuple %s2, %s3
  %s5 = sld [smem:[#allocation0]]
  $region61: #{tpu_custom_call.1} parent=0
    _
  %s7 = ssub.s32 1, %s5
  %s8 = scalar_select 0, %s7, %s5
  $region1: #{tpu_custom_call.1} parent=0
    #allocation4 [shape = 'u8[4096]{0}', space=vmem, size = 0x1000, scoped, tag = 'input window, operand 0']
    #allocation5 [shape = 's32[2]{0}', space=sflag, size = 0x8, scoped, tag = 'scoped memory for tpu_custom_call.1']
    %9 = vsyncpa [#allocation5], 0
    %s10 = scalar_lea.sflag [#allocation5], 1
    %11 = vsyncpa %s10, 0
    loop: start=0, step=1, limit=4
    $region2: #{tpu_custom_call.1} parent=1 // loop_pre_header
      _
    $region3: #{tpu_custom_call.1} parent=1 // loop_header
      %s13 = sphi 0, %s17
      %p14 = scmp.ge.s32.totalorder %s13, 4
      %s20 = sphi 0, %s39
      %s21 = sphi 0, %s35
      %s22 = sphi 0, %s31
      %s23 = sphi 0, %s20
      %s24 = sphi 0, %s21
      %s25 = sphi 0, %s22
      %s26 = sphi 0, %s23
      %s27 = sphi 0, %s24
      %s28 = sphi 0, %s25
      %s46 = sphi 0, %s48
      %s49 = sphi 0, %s46
      %s50 = sphi 0, %s49
      %s66 = sphi 0, %s50
      %s74 = sphi 0, %s76
      %s77 = sphi 0, %s74
      %s78 = sphi 0, %s77
      %s94 = sphi 0, %s78
      %s102 = sphi 0, %s104
      %s105 = sphi 0, %s102
      %s106 = sphi 0, %s105
      %s122 = sphi 0, %s106
      %s130 = sphi 0, %s132
      %s133 = sphi 0, %s130
      %s134 = sphi 0, %s133
      %s150 = sphi 0, %s134
    $region4: #{tpu_custom_call.1} parent=1 // loop_header_branch
      %16 = sbr.rel (%p14) target = $region8
    $region5: #{tpu_custom_call.1} parent=1 // loop_body
      %s18 = ssub.s32 %s13, 1
      %s19 = ssub.s32 %s13, 2
      %s29 = sadd.s32 1, %s22
      %p30 = scmp.ge.s32.totalorder %s29, 1
      %s31 = scalar_select %p30, 0, %s29
      %s32 = sadd.s32 1, %s21
      %s33 = scalar_select %p30, %s32, %s21
      %p34 = scmp.ge.s32.totalorder %s33, 1
      %s35 = scalar_select %p34, 0, %s33
      %s36 = sadd.s32 1, %s20
      %s37 = scalar_select %p34, %s36, %s20
      %p38 = scmp.ge.s32.totalorder %s37, 2
      %s39 = scalar_select %p38, 0, %s37
      %s40 = ssub.s32 %s20, %s39
      %s41 = ssub.s32 %s21, %s35
      %s42 = sor.u32 %s40, %s41
      %s43 = ssub.s32 %s22, %s31
      %s44 = sor.u32 %s42, %s43
      %p45 = scmp.eq.s32.totalorder %s44, 0
      %s47 = sadd.s32 %s46, 1
      %s48 = scalar_select %p45, %s46, %s47
      %p51 = pneg %p45
      %p52 = scmp.eq.s32.totalorder %s13, 1
      %p53 = por %p51, %p52
      %p54 = scmp.ne.s32.totalorder %s46, %s49
      %p55 = scmp.eq.s32.totalorder %s13, 0
      %p56 = por %p54, %p55
      %p57 = scmp.ne.s32.totalorder %s46, %s49
      %p58 = scmp.eq.s32.totalorder %s18, 1
      %p59 = por %p57, %p58
      %p60 = scmp.ne.s32.totalorder %s49, %s50
      %p61 = scmp.eq.s32.totalorder %s18, 0
      %p62 = por %p60, %p61
      %p63 = scmp.ne.s32.totalorder %s49, %s50
      %p64 = scmp.eq.s32.totalorder %s19, 1
      %p65 = por %p63, %p64
      %p67 = scmp.ne.s32.totalorder %s50, %s66
      %p68 = scmp.eq.s32.totalorder %s19, 0
      %p69 = por %p67, %p68
      %s70 = ssub.s32 %s20, %s39
      %s71 = ssub.s32 %s22, %s31
      %s72 = sor.u32 %s70, %s71
      %p73 = scmp.eq.s32.totalorder %s72, 0
      %s75 = sadd.s32 %s74, 1
      %s76 = scalar_select %p73, %s74, %s75
      %p79 = pneg %p73
      %p80 = scmp.eq.s32.totalorder %s13, 1
      %p81 = por %p79, %p80
      %p82 = scmp.ne.s32.totalorder %s74, %s77
      %p83 = scmp.eq.s32.totalorder %s13, 0
      %p84 = por %p82, %p83
      %p85 = scmp.ne.s32.totalorder %s74, %s77
      %p86 = scmp.eq.s32.totalorder %s18, 1
      %p87 = por %p85, %p86
      %p88 = scmp.ne.s32.totalorder %s77, %s78
      %p89 = scmp.eq.s32.totalorder %s18, 0
      %p90 = por %p88, %p89
      %p91 = scmp.ne.s32.totalorder %s77, %s78
      %p92 = scmp.eq.s32.totalorder %s19, 1
      %p93 = por %p91, %p92
      %p95 = scmp.ne.s32.totalorder %s78, %s94
      %p96 = scmp.eq.s32.totalorder %s19, 0
      %p97 = por %p95, %p96
      %s98 = ssub.s32 %s20, %s39
      %s99 = ssub.s32 %s21, %s35
      %s100 = sor.u32 %s98, %s99
      %p101 = scmp.eq.s32.totalorder %s100, 0
      %s103 = sadd.s32 %s102, 1
      %s104 = scalar_select %p101, %s102, %s103
      %p107 = pneg %p101
      %p108 = scmp.eq.s32.totalorder %s13, 1
      %p109 = por %p107, %p108
      %p110 = scmp.ne.s32.totalorder %s102, %s105
      %p111 = scmp.eq.s32.totalorder %s13, 0
      %p112 = por %p110, %p111
      %p113 = scmp.ne.s32.totalorder %s102, %s105
      %p114 = scmp.eq.s32.totalorder %s18, 1
      %p115 = por %p113, %p114
      %p116 = scmp.ne.s32.totalorder %s105, %s106
      %p117 = scmp.eq.s32.totalorder %s18, 0
      %p118 = por %p116, %p117
      %p119 = scmp.ne.s32.totalorder %s105, %s106
      %p120 = scmp.eq.s32.totalorder %s19, 1
      %p121 = por %p119, %p120
      %p123 = scmp.ne.s32.totalorder %s106, %s122
      %p124 = scmp.eq.s32.totalorder %s19, 0
      %p125 = por %p123, %p124
      %s126 = ssub.s32 %s20, %s39
      %s127 = ssub.s32 %s21, %s35
      %s128 = sor.u32 %s126, %s127
      %p129 = scmp.eq.s32.totalorder %s128, 0
      %s131 = sadd.s32 %s130, 1
      %s132 = scalar_select %p129, %s130, %s131
      %p135 = pneg %p129
      %p136 = scmp.eq.s32.totalorder %s13, 1
      %p137 = por %p135, %p136
      %p138 = scmp.ne.s32.totalorder %s130, %s133
      %p139 = scmp.eq.s32.totalorder %s13, 0
      %p140 = por %p138, %p139
      %p141 = scmp.ne.s32.totalorder %s130, %s133
      %p142 = scmp.eq.s32.totalorder %s18, 1
      %p143 = por %p141, %p142
      %p144 = scmp.ne.s32.totalorder %s133, %s134
      %p145 = scmp.eq.s32.totalorder %s18, 0
      %p146 = por %p144, %p145
      %p147 = scmp.ne.s32.totalorder %s133, %s134
      %p148 = scmp.eq.s32.totalorder %s19, 1
      %p149 = por %p147, %p148
      %p151 = scmp.ne.s32.totalorder %s134, %s150
      %p152 = scmp.eq.s32.totalorder %s19, 0
      %p153 = por %p151, %p152
      %p154 = scmp.le.s32.totalorder 1, %s13
      %p155 = scmp.lt.s32.totalorder %s13, 3
      %p156 = pnand %p154, %p155
      %p157 = pneg %p156
      // Predicated region
      $region9: #{tpu_custom_call.1} parent=5 // pred_check
        _
      $region10: #{tpu_custom_call.1} parent=5 // pred_check_branch
        %159 = sbr.rel (%p156) target = $region12
      $region11: #{tpu_custom_call.1} parent=5 // pred_region
        %s160 = ssub.s32 %s13, 1
      $region12: #{tpu_custom_call.1} parent=5 // pred_fallthru
        _
      %p161 = scmp.lt.s32.totalorder %s13, 2
      // Predicated region
      $region13: #{tpu_custom_call.1} parent=5 // pred_check
        %p162 = pneg %p161
      $region14: #{tpu_custom_call.1} parent=5 // pred_check_branch
        %164 = sbr.rel (%p162) target = $region16
      $region15: #{tpu_custom_call.1} parent=5 // pred_region
        // Predicated region
        $region17: #{tpu_custom_call.1} parent=15 // pred_check
          %p165 = pneg %p56
        $region18: #{tpu_custom_call.1} parent=15 // pred_check_branch
          %167 = sbr.rel (%p165) target = $region20
        $region19: #{tpu_custom_call.1} parent=15 // pred_region
          %s168 = sand.u32 %s46, 1
          %s169 = scalar_lea.sflag [#allocation5], %s168
          %s170 = sand.u32 %s46, 1
          %s171 = smul.addr %s170, 4
          %s172 = scalar_lea.vmem [#allocation4], %s171
          %s174 = ssub.s32 64, 64
          %175 = vsyncadd %s169, %s174
          %s176 = sadd.s32 %s22, %s21
          %s177 = sadd.s32 %s176, %s20
          %s178 = smul.addr %s177, 64
          %s179 = scalar_lea.hbm %s0, %s178
          %s181 = sshll.u32 %s172, 4
          %s182 = int_to_ptr.vmem [resolvable:$true] %s181
          %184 = dma.hbm_to_vmem [thread:$0]  %s179, 64, %s182, %s169
        $region20: #{tpu_custom_call.1} parent=15 // pred_fallthru
          _
        // Predicated region
        $region21: #{tpu_custom_call.1} parent=15 // pred_check
          %p185 = pneg %p84
        $region22: #{tpu_custom_call.1} parent=15 // pred_check_branch
          %187 = sbr.rel (%p185) target = $region24
        $region23: #{tpu_custom_call.1} parent=15 // pred_region
          %p188 = scmp.lt.s32.totalorder %s20, 1
          %s189 = scalar_select %p188, %s20, 1
          %p190 = scmp.lt.s32.totalorder %s22, 0
          %s191 = scalar_select %p190, %s22, 0
          %s192 = sadd.s32 %s191, %s189
          %s193 = scalar_lea.vmem %s1, %s192
        $region24: #{tpu_custom_call.1} parent=15 // pred_fallthru
          _
      $region16: #{tpu_custom_call.1} parent=5 // pred_fallthru
        _
      %p194 = scmp.le.s32.totalorder 1, %s13
      %p195 = scmp.lt.s32.totalorder %s13, 3
      %p196 = pnand %p194, %p195
      %p197 = pneg %p196
      // Predicated region
      $region25: #{tpu_custom_call.1} parent=5 // pred_check
        _
      $region26: #{tpu_custom_call.1} parent=5 // pred_check_branch
        %199 = sbr.rel (%p196) target = $region28
      $region27: #{tpu_custom_call.1} parent=5 // pred_region
        %s200 = ssub.s32 %s13, 1
        %s201 = sand.u32 %s49, 1
        %s202 = scalar_lea.sflag [#allocation5], %s201
        %s203 = sand.u32 %s49, 1
        %s204 = smul.addr %s203, 4
        %s205 = scalar_lea.vmem [#allocation4], %s204
        // Predicated region
        $region29: #{tpu_custom_call.1} parent=27 // pred_check
          %p206 = pneg %p62
        $region30: #{tpu_custom_call.1} parent=27 // pred_check_branch
          %208 = sbr.rel (%p206) target = $region32
        $region31: #{tpu_custom_call.1} parent=27 // pred_region
          %209 = dma.done %s202, 64
        $region32: #{tpu_custom_call.1} parent=27 // pred_fallthru
          _
        %s210 = sand.u32 %s49, 1
        %s211 = scalar_lea.sflag [#allocation5], %s210
        %s212 = sand.u32 %s49, 1
        %s213 = smul.addr %s212, 4
        %s214 = scalar_lea.vmem [#allocation4], %s213
        %p215 = pneg %p62
        %p216 = pneg %p59
        %p217 = scmp.lt.s32.totalorder %s23, 1
        %s218 = scalar_select %p217, %s23, 1
        %p219 = scmp.lt.s32.totalorder %s25, 0
        %s220 = scalar_select %p219, %s25, 0
        %s221 = sadd.s32 %s220, %s218
        %s222 = scalar_lea.vmem %s1, %s221
        %p223 = pneg %p90
        %p224 = pneg %p87
        %p225 = pneg %p118
        %p226 = pneg %p115
        %p227 = scmp.lt.s32.totalorder %s23, 1
        %s228 = scalar_select %p227, %s23, 1
        %p229 = scmp.lt.s32.totalorder %s24, 0
        %s230 = scalar_select %p229, %s24, 0
        %s231 = sadd.s32 %s230, %s228
        %s232 = smul.addr %s231, 4
        %s233 = scalar_lea.vmem %s2, %s232
        %p234 = pneg %p146
        %p235 = pneg %p143
        %p236 = scmp.lt.s32.totalorder %s23, 1
        %s237 = scalar_select %p236, %s23, 1
        %p238 = scmp.lt.s32.totalorder %s24, 0
        %s239 = scalar_select %p238, %s24, 0
        %s240 = sadd.s32 %s239, %s237
        %s241 = smul.addr %s240, 4
        %s242 = scalar_lea.vmem %s3, %s241
        %p243 = scmp.lt.s32.totalorder %s23, 1
        %s244 = scalar_select %p243, %s23, 1
        %p245 = scmp.lt.s32.totalorder %s25, 0
        %s246 = scalar_select %p245, %s25, 0
        %s247 = sadd.s32 %s246, %s244
        %s248 = scalar_lea.vmem %s1, %s247
        %p249 = scmp.lt.s32.totalorder %s23, 1
        %s250 = scalar_select %p249, %s23, 1
        %p251 = scmp.lt.s32.totalorder %s24, 0
        %s252 = scalar_select %p251, %s24, 0
        %s253 = sadd.s32 %s252, %s250
        %s254 = smul.addr %s253, 4
        %s255 = scalar_lea.vmem %s2, %s254
        %p256 = scmp.lt.s32.totalorder %s23, 1
        %s257 = scalar_select %p256, %s23, 1
        %p258 = scmp.lt.s32.totalorder %s24, 0
        %s259 = scalar_select %p258, %s24, 0
        %s260 = sadd.s32 %s259, %s257
        %s261 = smul.addr %s260, 4
        %s262 = scalar_lea.vmem %s3, %s261
        %p263 = scmp.eq.s32.totalorder %s25, 0
        // Predicated region
        $region33: #{tpu_custom_call.1} parent=27 // pred_check
          %p264 = pneg %p263
        $region34: #{tpu_custom_call.1} parent=27 // pred_check_branch
          %266 = sbr.rel (%p264) target = $region36
        $region35: #{tpu_custom_call.1} parent=27 // pred_region
          %vm267 = vcmask 125952
          %268 = vst.msk [vmem:[#allocation2] sm:$0xf] %vm267, 0.0
          %269 = vst.msk [vmem:[#allocation3] sm:$0xf] %vm267, 0.0
        $region36: #{tpu_custom_call.1} parent=27 // pred_fallthru
          _
        %v270 = vld [vmem:[%s205] sm:$0xf]
        %v271 = vld [vmem:[%s248] sm:$0x1]
        %v273 = vlaneseq
        %v274 = vshrl.u32 %v273, 7
        %v275 = vsub.s32 0, %v274
        %v276 = vrot.slane %v271, %v275
        %v278 = vmul.f32 %v270, %v276
        %v279 = vld [vmem:[#allocation2] sm:$0xf]
        %v280 = vadd.f32 %v279, %v278
        %vm281 = vcmask 125952
        %282 = vst.msk [vmem:[#allocation2] sm:$0xf] %vm281, %v280
        %v283 = vld [vmem:[#allocation3] sm:$0xf]
        %v284 = vmul.f32 %v270, %v278
        %v285 = vadd.f32 %v283, %v284
        %286 = vst.msk [vmem:[#allocation3] sm:$0xf] %vm281, %v285
        // Predicated region
        $region37: #{tpu_custom_call.1} parent=27 // pred_check
          %p287 = pneg %p263
        $region38: #{tpu_custom_call.1} parent=27 // pred_check_branch
          %289 = sbr.rel (%p287) target = $region40
        $region39: #{tpu_custom_call.1} parent=27 // pred_region
          %v290 = vld [vmem:[#allocation2] sm:$0xf]
          %v291 = vsel %vm281, %v290, 0.0
          %292 = vadd.xlane.f32.xlu0 %v291
          %v293 = vpop.xlane.xlu0 %292
          %vm294 = vcmask 3072
          %295 = vst.msk [vmem:[%s255] sm:$0xf] %vm294, %v293
          %v296 = vld [vmem:[#allocation3] sm:$0xf]
          %v297 = vsel %vm281, %v296, 0.0
          %298 = vadd.xlane.f32.xlu0 %v297
          %v299 = vpop.xlane.xlu0 %298
          %300 = vst.msk [vmem:[%s262] sm:$0xf] %vm294, %v299
        $region40: #{tpu_custom_call.1} parent=27 // pred_fallthru
          _
        %p301 = scmp.lt.s32.totalorder %s23, 1
        %s302 = scalar_select %p301, %s23, 1
        %p303 = scmp.lt.s32.totalorder %s24, 0
        %s304 = scalar_select %p303, %s24, 0
        %s305 = sadd.s32 %s304, %s302
        %s306 = smul.addr %s305, 4
        %s307 = scalar_lea.vmem %s2, %s306
        %p308 = scmp.lt.s32.totalorder %s23, 1
        %s309 = scalar_select %p308, %s23, 1
        %p310 = scmp.lt.s32.totalorder %s24, 0
        %s311 = scalar_select %p310, %s24, 0
        %s312 = sadd.s32 %s311, %s309
        %s313 = smul.addr %s312, 4
        %s314 = scalar_lea.vmem %s3, %s313
        // Predicated region
        $region41: #{tpu_custom_call.1} parent=27 // pred_check
          %p315 = pneg %p115
        $region42: #{tpu_custom_call.1} parent=27 // pred_check_branch
          %317 = sbr.rel (%p315) target = $region44
        $region43: #{tpu_custom_call.1} parent=27 // pred_region
          _
        $region44: #{tpu_custom_call.1} parent=27 // pred_fallthru
          _
        // Predicated region
        $region45: #{tpu_custom_call.1} parent=27 // pred_check
          %p318 = pneg %p143
        $region46: #{tpu_custom_call.1} parent=27 // pred_check_branch
          %320 = sbr.rel (%p318) target = $region48
        $region47: #{tpu_custom_call.1} parent=27 // pred_region
          _
        $region48: #{tpu_custom_call.1} parent=27 // pred_fallthru
          _
      $region28: #{tpu_custom_call.1} parent=5 // pred_fallthru
        _
      %p321 = scmp.le.s32.totalorder 2, %s13
      // Predicated region
      $region49: #{tpu_custom_call.1} parent=5 // pred_check
        %p322 = pneg %p321
      $region50: #{tpu_custom_call.1} parent=5 // pred_check_branch
        %324 = sbr.rel (%p322) target = $region52
      $region51: #{tpu_custom_call.1} parent=5 // pred_region
        %s325 = ssub.s32 %s13, 2
        // Predicated region
        $region53: #{tpu_custom_call.1} parent=51 // pred_check
          %p326 = pneg %p121
        $region54: #{tpu_custom_call.1} parent=51 // pred_check_branch
          %328 = sbr.rel (%p326) target = $region56
        $region55: #{tpu_custom_call.1} parent=51 // pred_region
          %p329 = scmp.lt.s32.totalorder %s26, 1
          %s330 = scalar_select %p329, %s26, 1
          %p331 = scmp.lt.s32.totalorder %s27, 0
          %s332 = scalar_select %p331, %s27, 0
          %s333 = sadd.s32 %s332, %s330
          %s334 = smul.addr %s333, 4
          %s335 = scalar_lea.vmem %s2, %s334
        $region56: #{tpu_custom_call.1} parent=51 // pred_fallthru
          _
        // Predicated region
        $region57: #{tpu_custom_call.1} parent=51 // pred_check
          %p336 = pneg %p149
        $region58: #{tpu_custom_call.1} parent=51 // pred_check_branch
          %338 = sbr.rel (%p336) target = $region60
        $region59: #{tpu_custom_call.1} parent=51 // pred_region
          %p339 = scmp.lt.s32.totalorder %s26, 1
          %s340 = scalar_select %p339, %s26, 1
          %p341 = scmp.lt.s32.totalorder %s27, 0
          %s342 = scalar_select %p341, %s27, 0
          %s343 = sadd.s32 %s342, %s340
          %s344 = smul.addr %s343, 4
          %s345 = scalar_lea.vmem %s3, %s344
        $region60: #{tpu_custom_call.1} parent=51 // pred_fallthru
          _
      $region52: #{tpu_custom_call.1} parent=5 // pred_fallthru
        _
    $region6: #{tpu_custom_call.1} parent=1 // loop_footer
      %s17 = sadd.s32 1, %s13
    $region7: #{tpu_custom_call.1} parent=1 // loop_footer_branch
      %12 = sbr.rel target = $region3
    $region8: #{tpu_custom_call.1} parent=1 // loop_exit
      _
    %346 = vsyncpa [#allocation5], 1
    %s347 = scalar_lea.sflag [#allocation5], 1
    %348 = vsyncpa %s347, 1

</llo_original>
